<compile_context>
chip_gen: v5e
topology: v5e:2x2
jax: 0.10.0
libtpu: 0.0.40
codegen_flags: <defaults>
</compile_context>

<pallas_src>
import functools
from typing import NamedTuple, Optional

import jax
import jax.numpy as jnp
from jax import lax
from jax.experimental import pallas as pl
from jax.experimental.pallas import tpu as pltpu

LN_EPS = 1e-5  # PyTorch nn.LayerNorm default


# --------------------------------------------------------------------------- utils
def _round_up(n, m):
    return (n + m - 1) // m * m


def _sublane_tile(dtype):
    # rows per packed sublane group: 8 for 4-byte, 16 for 2-byte, 32 for 1-byte dtypes.
    return max(8, 32 // jnp.dtype(dtype).itemsize)


def _device_info():
    """Returns (vmem_capacity_bytes, device_kind lowercased). Conservative fallbacks."""
    vmem = 64 << 20  # v7x per-TensorCore VMEM: safe lower bound for all generations
    try:
        vmem = int(pltpu.get_tpu_info().vmem_capacity_bytes)
    except Exception:
        pass
    kind = ""
    try:
        kind = jax.devices()[0].device_kind.lower()
    except Exception:
        pass
    return vmem, kind


# ----------------------------------------------------------------------- planning
class _Prepared(NamedTuple):
    wt: jax.Array                  # (d_pad, d_pad) transposed + padded weight, mm dtype
    bias2: jax.Array               # (1, d_pad) f32
    gamma2: Optional[jax.Array]    # (1, d_pad) f32 or None
    beta2: Optional[jax.Array]     # (1, d_pad) f32 or None
    d: int
    d_pad: int
    tk: Optional[int]              # None -> resident-weight (full-K) kernel
    use_norm: bool
    mm_dtype: object               # dtype used on the MXU


def _plan_weight(d, x_dtype, *, matmul_in_bf16, tile_m, k_tile, vmem_cap, kind):
    """Choose feature padding, K-tiling and matmul dtype for this device."""
    x_dtype = jnp.dtype(x_dtype)
    mm_dtype = jnp.dtype(jnp.bfloat16) if (matmul_in_bf16 and x_dtype == jnp.float32) else x_dtype
    itemsize = x_dtype.itemsize
    w_itemsize = mm_dtype.itemsize

    budget = max(32 << 20, vmem_cap - (8 << 20))          # device VMEM minus headroom
    tm_nom = min(int(tile_m), 128) if "v5" in kind else int(tile_m)

    if k_tile is not None:
        d_pad = max(256, _round_up(d, 256))
        tk = min(max(256, (int(k_tile) // 256) * 256), d_pad)
        while d_pad % tk:
            tk -= 256
        return d_pad, tk, mm_dtype

    # Resident-weight footprint (incl. f32 epilogue intermediates).
    d_pad128 = max(128, _round_up(d, 128))
    full_foot = (d_pad128 * d_pad128 * w_itemsize          # weight, single-buffered
                 + 2 * 2 * tm_nom * d_pad128 * itemsize    # x / out tiles, double-buffered
                 + 2 * tm_nom * d_pad128 * 4               # f32 epilogue temps
                 + 8 * d_pad128 * 4)                       # bias/gamma/beta vectors
    if full_foot <= int(0.65 * budget):
        return d_pad128, None, mm_dtype

    # K-tiled path: pad features to a multiple of 256 (MXU K/N width on v6e/v7x),
    # pick the largest tk (multiple of 256, divisor of d_pad) whose double-buffered
    # weight slab fits next to the fixed buffers.
    d_pad = max(256, _round_up(d, 256))
    fixed = (2 * 2 * tm_nom * d_pad * itemsize             # x / out tiles
             + tm_nom * d_pad * 4                          # f32 accumulator scratch
             + 2 * tm_nom * d_pad * 4                      # f32 epilogue temps
             + 8 * d_pad * 4)
    avail = max(budget - fixed, 2 * 256 * d_pad * w_itemsize)
    tk_cap = max(256, (avail // (2 * d_pad * w_itemsize)) // 256 * 256)
    m = d_pad // 256
    best = 1
    for t in range(1, m + 1):
        if m % t == 0 and 256 * t <= tk_cap:
            best = t
    return d_pad, 256 * best, mm_dtype


def prepare_residual_linear_params(weight, bias, gamma=None, beta=None, *,
                                   x_dtype=jnp.float32, use_norm=True,
                                   matmul_in_bf16=False, tile_m=256, k_tile=None):
    """Hoisted weight prep (transpose + pad + cast). Cache and reuse across calls."""
    d = weight.shape[0]
    vmem_cap, kind = _device_info()
    d_pad, tk, mm_dtype = _plan_weight(d, x_dtype, matmul_in_bf16=matmul_in_bf16,
                                       tile_m=tile_m, k_tile=k_tile,
                                       vmem_cap=vmem_cap, kind=kind)
    pad = d_pad - d
    wt = weight.T.astype(mm_dtype)                          # (in, out) so kernel does x @ W^T
    if pad:
        wt = jnp.pad(wt, ((0, pad), (0, pad)))
        bias_p = jnp.pad(bias, (0, pad))
    else:
        bias_p = bias
    bias2 = bias_p.reshape(1, d_pad).astype(jnp.float32)
    gamma2 = beta2 = None
    if use_norm:
        g = gamma if pad == 0 else jnp.pad(gamma, (0, pad))
        b_ = beta if pad == 0 else jnp.pad(beta, (0, pad))
        gamma2 = g.reshape(1, d_pad).astype(jnp.float32)
        beta2 = b_.reshape(1, d_pad).astype(jnp.float32)
    return _Prepared(wt, bias2, gamma2, beta2, d, d_pad, tk, use_norm, mm_dtype)


# ------------------------------------------------------------------------ kernels
def _layer_norm(z, g, be, d, d_pad):
    """Two-pass LayerNorm over the real feature width (padded lanes masked out)."""
    inv_d = 1.0 / d
    mean = jnp.sum(z, axis=-1, keepdims=True) * inv_d
    diff = z - mean
    if d_pad != d:
        lane = lax.broadcasted_iota(jnp.int32, z.shape, z.ndim - 1)
        diff = jnp.where(lane < d, diff, 0.0)
    var = jnp.sum(diff * diff, axis=-1, keepdims=True) * inv_d
    return diff * lax.rsqrt(var + LN_EPS) * g + be


def _fullk_kernel(*refs, d, d_pad, use_norm, mm_dtype):
    if use_norm:
        x_ref, wt_ref, b_ref, g_ref, be_ref, o_ref = refs
    else:
        x_ref, wt_ref, b_ref, o_ref = refs
        g_ref = be_ref = None
    x = x_ref[...]
    lhs = x if x.dtype == mm_dtype else x.astype(mm_dtype)
    z = jnp.dot(lhs, wt_ref[...], preferred_element_type=jnp.float32)
    z = jnp.maximum(z + b_ref[...], 0.0)
    if use_norm:
        z = _layer_norm(z, g_ref[...], be_ref[...], d, d_pad)
    o_ref[...] = (x.astype(jnp.float32) + z).astype(o_ref.dtype)


def _ktiled_kernel(*refs, d, d_pad, tk, use_norm, mm_dtype):
    if use_norm:
        x_ref, wt_ref, b_ref, g_ref, be_ref, o_ref, acc_ref = refs
    else:
        x_ref, wt_ref, b_ref, o_ref, acc_ref = refs
        g_ref = be_ref = None
    k = pl.program_id(1)

    @pl.when(k == 0)
    def _():
        acc_ref[...] = jnp.zeros_like(acc_ref)

    start = pl.multiple_of(k * tk, tk)
    xk = x_ref[:, pl.ds(start, tk)]
    lhs = xk if xk.dtype == mm_dtype else xk.astype(mm_dtype)
    acc_ref[...] += jnp.dot(lhs, wt_ref[...], preferred_element_type=jnp.float32)

    @pl.when(k == pl.num_programs(1) - 1)
    def _():
        z = jnp.maximum(acc_ref[...] + b_ref[...], 0.0)
        if use_norm:
            z = _layer_norm(z, g_ref[...], be_ref[...], d, d_pad)
        o_ref[...] = (x_ref[...].astype(jnp.float32) + z).astype(o_ref.dtype)


# ----------------------------------------------------------------------- wrapper
def residual_linear_layer(x, weight=None, bias=None, gamma=None, beta=None, *,
                          use_norm=True, tile_m=256, matmul_in_bf16=False,
                          k_tile=None, prepared=None):
    """Fused Linear -> ReLU -> [LayerNorm] -> residual add.

    x: (..., d_model). weight: (d_model, d_model) in PyTorch (out, in) layout.
    Pass `prepared=prepare_residual_linear_params(...)` to hoist weight prep out
    of the hot path.
    """
    orig_shape = x.shape
    d = orig_shape[-1]
    x2d = x.reshape(-1, d)
    rows = x2d.shape[0]
    dt = x2d.dtype

    vmem_cap, kind = _device_info()

    if prepared is None:
        prepared = prepare_residual_linear_params(
            weight, bias, gamma, beta, x_dtype=dt, use_norm=use_norm,
            matmul_in_bf16=matmul_in_bf16, tile_m=tile_m, k_tile=k_tile)
    assert prepared.d == d and prepared.use_norm == use_norm

    d_pad, tk, mm_dtype = prepared.d_pad, prepared.tk, prepared.mm_dtype

    # ---- row tiling: sublane-rounded, v5e-capped, >=2 grid steps on v7x ----
    sub = _sublane_tile(dt)
    tm_cap = min(int(tile_m), 128) if "v5" in kind else int(tile_m)
    tm = max(sub, min(tm_cap, _round_up(rows, sub)))
    if "v7" in kind or "tpu7" in kind:
        while tm > sub and -(-rows // tm) < 2:
            tm = max(sub, _round_up(tm // 2, sub))
    rows_pad = _round_up(rows, tm)

    if rows_pad != rows or d_pad != d:
        x2d = jnp.pad(x2d, ((0, rows_pad - rows), (0, d_pad - d)))

    itemsize = jnp.dtype(dt).itemsize
    w_itemsize = jnp.dtype(mm_dtype).itemsize

    invariant = pl.Buffered(1)  # grid-invariant operands: single buffer
    kernel_args = [x2d, prepared.wt, prepared.bias2]

    if tk is None:
        # Resident-weight kernel, 1-D grid over row tiles.
        in_specs = [
            pl.BlockSpec((tm, d_pad), lambda i: (i, 0)),
            pl.BlockSpec((d_pad, d_pad), lambda i: (0, 0), pipeline_mode=invariant),
            pl.BlockSpec((1, d_pad), lambda i: (0, 0), pipeline_mode=invariant),
        ]
        if use_norm:
            in_specs += [pl.BlockSpec((1, d_pad), lambda i: (0, 0), pipeline_mode=invariant),
                         pl.BlockSpec((1, d_pad), lambda i: (0, 0), pipeline_mode=invariant)]
            kernel_args += [prepared.gamma2, prepared.beta2]
        out_spec = pl.BlockSpec((tm, d_pad), lambda i: (i, 0))
        grid = (rows_pad // tm,)
        dims = ("parallel",)
        scratch = []
        kernel = functools.partial(_fullk_kernel, d=d, d_pad=d_pad,
                                   use_norm=use_norm, mm_dtype=mm_dtype)
        vmem_est = (d_pad * d_pad * w_itemsize
                    + 2 * 2 * tm * d_pad * itemsize
                    + 2 * tm * d_pad * 4
                    + 8 * d_pad * 4)
    else:
        # K-tiled kernel: trailing "arbitrary" reduction axis over feature blocks.
        nk = d_pad // tk
        in_specs = [
            pl.BlockSpec((tm, d_pad), lambda i, k: (i, 0)),
            pl.BlockSpec((tk, d_pad), lambda i, k: (k, 0)),
            pl.BlockSpec((1, d_pad), lambda i, k: (0, 0), pipeline_mode=invariant),
        ]
        if use_norm:
            in_specs += [pl.BlockSpec((1, d_pad), lambda i, k: (0, 0), pipeline_mode=invariant),
                         pl.BlockSpec((1, d_pad), lambda i, k: (0, 0), pipeline_mode=invariant)]
            kernel_args += [prepared.gamma2, prepared.beta2]
        out_spec = pl.BlockSpec((tm, d_pad), lambda i, k: (i, 0))
        grid = (rows_pad // tm, nk)
        dims = ("parallel", "arbitrary")
        scratch = [pltpu.VMEM((tm, d_pad), jnp.float32)]
        kernel = functools.partial(_ktiled_kernel, d=d, d_pad=d_pad, tk=tk,
                                   use_norm=use_norm, mm_dtype=mm_dtype)
        vmem_est = (2 * tk * d_pad * w_itemsize
                    + 2 * 2 * tm * d_pad * itemsize
                    + tm * d_pad * 4
                    + 2 * tm * d_pad * 4
                    + 8 * d_pad * 4)

    # Device-aware VMEM limit: estimate (+slack), floored, clamped to physical - headroom.
    vmem_limit = int(1.25 * vmem_est) + (4 << 20)
    vmem_limit = max(vmem_limit, 8 << 20)
    vmem_limit = min(vmem_limit, max(vmem_cap - (8 << 20), 16 << 20))

    flops = 2 * rows_pad * d_pad * d_pad
    bytes_accessed = (2 * rows_pad * d_pad * itemsize
                      + d_pad * d_pad * w_itemsize + 4 * d_pad * 4)
    cost = pl.CostEstimate(flops=flops, transcendentals=0, bytes_accessed=bytes_accessed)

    out = pl.pallas_call(
        kernel,
        out_shape=jax.ShapeDtypeStruct((rows_pad, d_pad), dt),
        grid_spec=pltpu.PrefetchScalarGridSpec(
            num_scalar_prefetch=0,
            grid=grid,
            in_specs=in_specs,
            out_specs=out_spec,
            scratch_shapes=scratch,
        ),
        compiler_params=pltpu.CompilerParams(
            dimension_semantics=dims,
            vmem_limit_bytes=int(vmem_limit),
        ),
        cost_estimate=cost,
    )(*kernel_args)

    out = out[:rows, :d]
    return out.reshape(orig_shape)


# --------------------------------------------------------------------- reference
def _reference(x, weight, bias, gamma, beta, use_norm=True):
    z = jnp.einsum("...i,oi->...o", x.astype(jnp.float32),
                   weight.astype(jnp.float32)) + bias.astype(jnp.float32)
    z = jnp.maximum(z, 0.0)
    if use_norm:
        mean = jnp.mean(z, axis=-1, keepdims=True)
        var = jnp.mean((z - mean) ** 2, axis=-1, keepdims=True)
        z = (z - mean) * lax.rsqrt(var + LN_EPS) * gamma + beta
    return (x.astype(jnp.float32) + z).astype(x.dtype)


if __name__ == "__main__":
    key = jax.random.PRNGKey(0)
    kx, kw, kb, kx2, kw2, kb2 = jax.random.split(key, 6)

    # --- Case 1: small d_model, resident-weight (full-K) path ---
    d_model, batch, seq = 32, 2, 8
    x = jax.random.normal(kx, (batch, seq, d_model), dtype=jnp.float32)
    bound = 1.0 / (d_model ** 0.5)
    weight = jax.random.uniform(kw, (d_model, d_model), minval=-bound, maxval=bound,
                                dtype=jnp.float32)
    bias = jax.random.uniform(kb, (d_model,), minval=-bound, maxval=bound,
                              dtype=jnp.float32)
    gamma = jnp.ones((d_model,), jnp.float32)
    beta = jnp.zeros((d_model,), jnp.float32)

    # Hoisted weight prep (cacheable across calls).
    prepared = prepare_residual_linear_params(weight, bias, gamma, beta,
                                              x_dtype=x.dtype, use_norm=True)
    out = jax.block_until_ready(residual_linear_layer(x, prepared=prepared, use_norm=True))
    ref = _reference(x, weight, bias, gamma, beta, use_norm=True)
    assert out.shape == x.shape
    assert jnp.allclose(out, ref, atol=2e-4, rtol=2e-4), "mismatch (norm, full-K)"

    out2 = jax.block_until_ready(residual_linear_layer(x, weight, bias, use_norm=False))
    ref2 = _reference(x, weight, bias, gamma, beta, use_norm=False)
    assert jnp.allclose(out2, ref2, atol=2e-4, rtol=2e-4), "mismatch (no-norm, full-K)"

    # --- Case 2: forced K-tiled reduction path (feature dim padded 384 -> 512, tk=256) ---
    d2 = 384
    x3 = jax.random.normal(kx2, (2, 8, d2), dtype=jnp.float32)
    bound2 = 1.0 / (d2 ** 0.5)
    w3 = jax.random.uniform(kw2, (d2, d2), minval=-bound2, maxval=bound2, dtype=jnp.float32)
    b3 = jax.random.uniform(kb2, (d2,), minval=-bound2, maxval=bound2, dtype=jnp.float32)
    g3 = jnp.ones((d2,), jnp.float32)
    be3 = jnp.zeros((d2,), jnp.float32)
    out3 = jax.block_until_ready(
        residual_linear_layer(x3, w3, b3, g3, be3, use_norm=True, k_tile=256))
    ref3 = _reference(x3, w3, b3, g3, be3, use_norm=True)
    assert jnp.allclose(out3, ref3, atol=2e-3, rtol=2e-3), "mismatch (norm, K-tiled)"

    # TODO(synk): matmul_in_bf16=True is available for v6e/v7x MXU throughput but changes
    # numerics vs the f32 reference, so it is left off here.
    print("KERNEL_OK")
</pallas_src>

<mosaic_0001>
module attributes {stable_mosaic.version = 11 : i64} {
  func.func @_fullk_kernel(%arg0: i32, %arg1: memref<16x128xf32, #tpu.memory_space<vmem>>, %arg2: memref<128x128xf32, #tpu.memory_space<vmem>>, %arg3: memref<1x128xf32, #tpu.memory_space<vmem>>, %arg4: memref<1x128xf32, #tpu.memory_space<vmem>>, %arg5: memref<1x128xf32, #tpu.memory_space<vmem>>, %arg6: memref<16x128xf32, #tpu.memory_space<vmem>>) attributes {dimension_semantics = [#tpu.dimension_semantics<parallel>], iteration_bounds = array<i64: 1>, scalar_prefetch = 0 : i64, scratch_operands = 0 : i64, tpu.core_type = #tpu.core_type<tc>, window_params = [{transform_indices = @transform_0, window_bounds = array<i64: 16, 128>}, {pipeline_mode = #tpu.pipeline_mode<synchronous>, transform_indices = @transform_1, window_bounds = array<i64: 128, 128>}, {pipeline_mode = #tpu.pipeline_mode<synchronous>, transform_indices = @transform_2, window_bounds = array<i64: 1, 128>}, {pipeline_mode = #tpu.pipeline_mode<synchronous>, transform_indices = @transform_3, window_bounds = array<i64: 1, 128>}, {pipeline_mode = #tpu.pipeline_mode<synchronous>, transform_indices = @transform_4, window_bounds = array<i64: 1, 128>}, {transform_indices = @transform_5, window_bounds = array<i64: 16, 128>}]} {
    %c0 = arith.constant 0 : index
    %c0_0 = arith.constant 0 : index
    %0 = vector.load %arg1[%c0, %c0_0] : memref<16x128xf32, #tpu.memory_space<vmem>>, vector<16x128xf32>
    %c0_1 = arith.constant 0 : index
    %c0_2 = arith.constant 0 : index
    %1 = vector.load %arg2[%c0_1, %c0_2] : memref<128x128xf32, #tpu.memory_space<vmem>>, vector<128x128xf32>
    %cst = arith.constant dense<0.000000e+00> : vector<16x128xf32>
    %2 = tpu.matmul %0, %1, %cst {dimension_numbers = #tpu.dot_dimension_numbers<[1], [0], [0], [1], [0, 0, 1, 1], [], []>} : vector<16x128xf32>, vector<128x128xf32>, vector<16x128xf32> -> vector<16x128xf32>
    %c0_3 = arith.constant 0 : index
    %c0_4 = arith.constant 0 : index
    %3 = vector.load %arg3[%c0_3, %c0_4] : memref<1x128xf32, #tpu.memory_space<vmem>>, vector<1x128xf32>
    %4 = vector.broadcast %3 : vector<1x128xf32> to vector<16x128xf32>
    %5 = arith.addf %2, %4 : vector<16x128xf32>
    %cst_5 = arith.constant 0.000000e+00 : f32
    %6 = vector.broadcast %cst_5 : f32 to vector<16x128xf32>
    %7 = arith.maximumf %5, %6 : vector<16x128xf32>
    %c0_6 = arith.constant 0 : index
    %c0_7 = arith.constant 0 : index
    %8 = vector.load %arg4[%c0_6, %c0_7] : memref<1x128xf32, #tpu.memory_space<vmem>>, vector<1x128xf32>
    %c0_8 = arith.constant 0 : index
    %c0_9 = arith.constant 0 : index
    %9 = vector.load %arg5[%c0_8, %c0_9] : memref<1x128xf32, #tpu.memory_space<vmem>>, vector<1x128xf32>
    %cst_10 = arith.constant dense<0.000000e+00> : vector<16xf32>
    %10 = vector.multi_reduction <add>, %7, %cst_10 [1] : vector<16x128xf32> to vector<16xf32>
    %11 = vector.shape_cast %10 : vector<16xf32> to vector<16x1xf32>
    %cst_11 = arith.constant 3.125000e-02 : f32
    %12 = vector.broadcast %cst_11 : f32 to vector<16x1xf32>
    %13 = arith.mulf %11, %12 : vector<16x1xf32>
    %14 = vector.broadcast %13 : vector<16x1xf32> to vector<16x128xf32>
    %15 = arith.subf %7, %14 : vector<16x128xf32>
    %16 = tpu.iota {dimensions = array<i32: 1>} : vector<16x128xi32>
    %c32_i32 = arith.constant 32 : i32
    %17 = vector.broadcast %c32_i32 : i32 to vector<16x128xi32>
    %18 = arith.cmpi slt, %16, %17 : vector<16x128xi32>
    %cst_12 = arith.constant 0.000000e+00 : f32
    %19 = vector.broadcast %cst_12 : f32 to vector<16x128xf32>
    %20 = arith.select %18, %15, %19 : vector<16x128xi1>, vector<16x128xf32>
    %21 = arith.mulf %20, %20 : vector<16x128xf32>
    %cst_13 = arith.constant dense<0.000000e+00> : vector<16xf32>
    %22 = vector.multi_reduction <add>, %21, %cst_13 [1] : vector<16x128xf32> to vector<16xf32>
    %23 = vector.shape_cast %22 : vector<16xf32> to vector<16x1xf32>
    %cst_14 = arith.constant 3.125000e-02 : f32
    %24 = vector.broadcast %cst_14 : f32 to vector<16x1xf32>
    %25 = arith.mulf %23, %24 : vector<16x1xf32>
    %cst_15 = arith.constant 9.99999974E-6 : f32
    %26 = vector.broadcast %cst_15 : f32 to vector<16x1xf32>
    %27 = arith.addf %25, %26 : vector<16x1xf32>
    %28 = math.rsqrt %27 : vector<16x1xf32>
    %29 = vector.broadcast %28 : vector<16x1xf32> to vector<16x128xf32>
    %30 = arith.mulf %20, %29 : vector<16x128xf32>
    %31 = vector.broadcast %8 : vector<1x128xf32> to vector<16x128xf32>
    %32 = arith.mulf %30, %31 : vector<16x128xf32>
    %33 = vector.broadcast %9 : vector<1x128xf32> to vector<16x128xf32>
    %34 = arith.addf %32, %33 : vector<16x128xf32>
    %35 = arith.addf %0, %34 : vector<16x128xf32>
    %c0_16 = arith.constant 0 : index
    %c0_17 = arith.constant 0 : index
    %36 = vector.load %arg6[%c0_16, %c0_17] : memref<16x128xf32, #tpu.memory_space<vmem>>, vector<16x128xf32>
    tpu.vector_store %arg6[%c0_16, %c0_17], %35 {strides = array<i32>} : memref<16x128xf32, #tpu.memory_space<vmem>>, vector<16x128xf32>,
    return
  }
  func.func @transform_0(%arg0: i32) -> (i32, i32) {
    %c0_i32 = arith.constant 0 : i32
    %c0_i32_0 = arith.constant 0 : i32
    return %arg0, %c0_i32 : i32, i32
  }
  func.func @transform_1(%arg0: i32) -> (i32, i32) {
    %c0_i32 = arith.constant 0 : i32
    %c0_i32_0 = arith.constant 0 : i32
    %c0_i32_1 = arith.constant 0 : i32
    return %c0_i32, %c0_i32_0 : i32, i32
  }
  func.func @transform_2(%arg0: i32) -> (i32, i32) {
    %c0_i32 = arith.constant 0 : i32
    %c0_i32_0 = arith.constant 0 : i32
    %c0_i32_1 = arith.constant 0 : i32
    return %c0_i32, %c0_i32_0 : i32, i32
  }
  func.func @transform_3(%arg0: i32) -> (i32, i32) {
    %c0_i32 = arith.constant 0 : i32
    %c0_i32_0 = arith.constant 0 : i32
    %c0_i32_1 = arith.constant 0 : i32
    return %c0_i32, %c0_i32_0 : i32, i32
  }
  func.func @transform_4(%arg0: i32) -> (i32, i32) {
    %c0_i32 = arith.constant 0 : i32
    %c0_i32_0 = arith.constant 0 : i32
    %c0_i32_1 = arith.constant 0 : i32
    return %c0_i32, %c0_i32_0 : i32, i32
  }
  func.func @transform_5(%arg0: i32) -> (i32, i32) {
    %c0_i32 = arith.constant 0 : i32
    %c0_i32_0 = arith.constant 0 : i32
    return %arg0, %c0_i32 : i32, i32
  }
}

</mosaic_0001>

<llo_original>
// kernel: tpu_custom_call.1
$region0: #{tpu_custom_call.1}
  #allocation0 [shape = 'u32[]', space=smem, size = 0x4, offset = 0x4, fixed_abs, tag = 'smem constant byte address 0x4 - core index']
  #allocation1 [shape = 'u32[72,128]{1,0:T(1,128)}', space=vmem, size = 0x9000, scoped, tag = 'internal scratch']
  %s0 = inlined_call_operand.hbm [shape: f32[16,128], index: 0, kind: input, shape index: {}]
  %s1 = inlined_call_operand.hbm [shape: f32[128,128], index: 1, kind: input, shape index: {}]
  %s2 = inlined_call_operand.vmem [shape: f32[1,128], index: 2, kind: input, shape index: {}]
  %s3 = inlined_call_operand.vmem [shape: f32[1,128], index: 3, kind: input, shape index: {}]
  %s4 = inlined_call_operand.vmem [shape: f32[1,128], index: 4, kind: input, shape index: {}]
  %s5 = inlined_call_operand.hbm [shape: f32[16,128], index: 5, kind: output, shape index: {}]
  %s6 = sld [smem:[#allocation0]]
  $region38: #{tpu_custom_call.1} parent=0
    _
  %s8 = ssub.s32 1, %s6
  %s9 = scalar_select 0, %s8, %s6
  $region1: #{tpu_custom_call.1} parent=0
    #allocation2 [shape = 'u8[8192]{0}', space=vmem, size = 0x2000, scoped, tag = 'input window, operand 0, single buffered']
    #allocation3 [shape = 's32[1]{0}', space=sflag, size = 0x4, scoped, tag = 'scoped memory for tpu_custom_call.1']
    #allocation4 [shape = 's32[1]{0}', space=sflag, size = 0x4, scoped, tag = 'scoped memory for tpu_custom_call.1']
    #allocation5 [shape = 'u8[65536]{0}', space=vmem, size = 0x10000, scoped, tag = 'input window, operand 1, single buffered']
    #allocation6 [shape = 's32[1]{0}', space=sflag, size = 0x4, scoped, tag = 'scoped memory for tpu_custom_call.1']
    #allocation7 [shape = 'u8[8192]{0}', space=vmem, size = 0x2000, scoped, tag = 'output window, operand 0, single buffered']
    %10 = vsyncpa [#allocation3], 0
    %11 = vsyncpa [#allocation6], 0
    %12 = vsyncpa [#allocation4], 0
    // Predicated region
    $region2: #{tpu_custom_call.1} parent=1 // pred_check
      _
    $region3: #{tpu_custom_call.1} parent=1 // pred_check_branch
      %14 = sbr.rel (0) target = $region5
    $region4: #{tpu_custom_call.1} parent=1 // pred_region
      %16 = vsyncadd [#allocation3], 0
      %s17 = sshll.u32 %s0, 4
      %s18 = int_to_ptr.hbm [resolvable:$true] %s17
      %s19 = sshll.u32 [#allocation2], 4
      %s20 = int_to_ptr.vmem [resolvable:$true] %s19
      %25 = dma.hbm_to_vmem [thread:$0]  %s18, 256, %s20, [#allocation3], 128, 128, 8
    $region5: #{tpu_custom_call.1} parent=1 // pred_fallthru
      _
    // Predicated region
    $region6: #{tpu_custom_call.1} parent=1 // pred_check
      _
    $region7: #{tpu_custom_call.1} parent=1 // pred_check_branch
      %27 = sbr.rel (0) target = $region9
    $region8: #{tpu_custom_call.1} parent=1 // pred_region
      %29 = vsyncadd [#allocation6], 0
      %s30 = sshll.u32 %s1, 4
      %s31 = int_to_ptr.hbm [resolvable:$true] %s30
      %s32 = sshll.u32 [#allocation5], 4
      %s33 = int_to_ptr.vmem [resolvable:$true] %s32
      %38 = dma.hbm_to_vmem [thread:$0]  %s31, 2048, %s33, [#allocation6], 128, 128, 8
    $region9: #{tpu_custom_call.1} parent=1 // pred_fallthru
      _
    // Predicated region
    $region10: #{tpu_custom_call.1} parent=1 // pred_check
      _
    $region11: #{tpu_custom_call.1} parent=1 // pred_check_branch
      %40 = sbr.rel (0) target = $region13
    $region12: #{tpu_custom_call.1} parent=1 // pred_region
      _
    $region13: #{tpu_custom_call.1} parent=1 // pred_fallthru
      _
    // Predicated region
    $region14: #{tpu_custom_call.1} parent=1 // pred_check
      _
    $region15: #{tpu_custom_call.1} parent=1 // pred_check_branch
      %42 = sbr.rel (0) target = $region17
    $region16: #{tpu_custom_call.1} parent=1 // pred_region
      _
    $region17: #{tpu_custom_call.1} parent=1 // pred_fallthru
      _
    // Predicated region
    $region18: #{tpu_custom_call.1} parent=1 // pred_check
      _
    $region19: #{tpu_custom_call.1} parent=1 // pred_check_branch
      %44 = sbr.rel (0) target = $region21
    $region20: #{tpu_custom_call.1} parent=1 // pred_region
      _
    $region21: #{tpu_custom_call.1} parent=1 // pred_fallthru
      _
    // Predicated region
    $region22: #{tpu_custom_call.1} parent=1 // pred_check
      _
    $region23: #{tpu_custom_call.1} parent=1 // pred_check_branch
      %46 = sbr.rel (0) target = $region25
    $region24: #{tpu_custom_call.1} parent=1 // pred_region
      %48 = dma.done [#allocation3], 256
    $region25: #{tpu_custom_call.1} parent=1 // pred_fallthru
      _
    // Predicated region
    $region26: #{tpu_custom_call.1} parent=1 // pred_check
      _
    $region27: #{tpu_custom_call.1} parent=1 // pred_check_branch
      %50 = sbr.rel (0) target = $region29
    $region28: #{tpu_custom_call.1} parent=1 // pred_region
      %52 = dma.done [#allocation6], 2048
    $region29: #{tpu_custom_call.1} parent=1 // pred_fallthru
      _
    %v53 = vld [vmem:[#allocation2] sm:$0xff]
    %v54 = vld [vmem:[#allocation2 + $0x8] sm:$0xff]
    %v55 = vld [vmem:[#allocation5] sm:$0xff]
    %v56 = vld [vmem:[#allocation5 + $0x8] sm:$0xff]
    %v57 = vld [vmem:[#allocation5 + $0x10] sm:$0xff]
    %v58 = vld [vmem:[#allocation5 + $0x18] sm:$0xff]
    %v59 = vld [vmem:[#allocation5 + $0x20] sm:$0xff]
    %v60 = vld [vmem:[#allocation5 + $0x28] sm:$0xff]
    %v61 = vld [vmem:[#allocation5 + $0x30] sm:$0xff]
    %v62 = vld [vmem:[#allocation5 + $0x38] sm:$0xff]
    %v63 = vld [vmem:[#allocation5 + $0x40] sm:$0xff]
    %v64 = vld [vmem:[#allocation5 + $0x48] sm:$0xff]
    %v65 = vld [vmem:[#allocation5 + $0x50] sm:$0xff]
    %v66 = vld [vmem:[#allocation5 + $0x58] sm:$0xff]
    %v67 = vld [vmem:[#allocation5 + $0x60] sm:$0xff]
    %v68 = vld [vmem:[#allocation5 + $0x68] sm:$0xff]
    %v69 = vld [vmem:[#allocation5 + $0x70] sm:$0xff]
    %v70 = vld [vmem:[#allocation5 + $0x78] sm:$0xff]
    %v71 = vld [vmem:[%s2] sm:$0x1]
    %v73 = vperm.slane %v71, 0
    %75 = vmatpush.msra.mxu0 %v70
    %76 = vmatpush.msra.mxu0 %v69
    %77 = vmatpush.msra.mxu0 %v68
    %78 = vmatpush.msra.mxu0 %v67
    %79 = vmatpush.msra.mxu0 %v66
    %80 = vmatpush.msra.mxu0 %v65
    %81 = vmatpush.msra.mxu0 %v64
    %82 = vmatpush.msra.mxu0 %v63
    %83 = vmatpush.msra.mxu0 %v62
    %84 = vmatpush.msra.mxu0 %v61
    %85 = vmatpush.msra.mxu0 %v60
    %86 = vmatpush.msra.mxu0 %v59
    %87 = vmatpush.msra.mxu0 %v58
    %88 = vmatpush.msra.mxu0 %v57
    %89 = vmatpush.msra.mxu0 %v56
    %90 = vmatpush.msra.mxu0 %v55
    %91 = vmatmul.f32.gmra.mxu0 %v53
    %v92 = vpop.f32.mrf.mxu0
    %v93 = vadd.f32 %v73, %v92
    %94 = vmatmul.f32.gmra.mxu0 %v54
    %v95 = vpop.f32.mrf.mxu0
    %v96 = vadd.f32 %v73, %v95
    %97 = vdwg.mxu0
    %v98 = vmax.f32 %v93, 0.0
    %v99 = vmax.f32 %v96, 0.0
    %v100 = vld [vmem:[%s3] sm:$0x1]
    %v101 = vld [vmem:[%s4] sm:$0x1]
    %102 = vadd.xlane.f32.xlu0 %v98
    %v103 = vpop.xlane.xlu0 %102
    %104 = vadd.xlane.f32.xlu0 %v99
    %v105 = vpop.xlane.xlu0 %104
    %v106 = vmul.f32 %v103, 0.03125
    %v107 = vmul.f32 %v105, 0.03125
    %v108 = vsub.f32 %v98, %v106
    %v109 = vsub.f32 %v99, %v107
    %v110 = vlaneseq
    %v111 = vand.u32 %v110, 127
    %vm112 = vcmp.lt.s32.totalorder %v111, 32
    %v113 = vsel %vm112, %v108, 0.0
    %v114 = vsel %vm112, %v109, 0.0
    %v115 = vmul.f32 %v113, %v113
    %v116 = vmul.f32 %v114, %v114
    %117 = vadd.xlane.f32.xlu0 %v115
    %v118 = vpop.xlane.xlu0 %117
    %119 = vadd.xlane.f32.xlu0 %v116
    %v120 = vpop.xlane.xlu0 %119
    %v121 = vmul.f32 %v118, 0.03125
    %v122 = vmul.f32 %v120, 0.03125
    %v123 = vadd.f32 %v121, 1e-05
    %v124 = vadd.f32 %v122, 1e-05
    %v125 = vrsqrt.pop %v123
    %v126 = vmul.f32 %v125, %v123
    %v127 = vmul.f32 %v126, %v125
    %v128 = vmul.f32 0.5, %v127
    %v129 = vsub.f32 1.5, %v128
    %v130 = vmul.f32 %v125, %v129
    %vm131 = vweird.f32 %v123
    %vm132 = vweird.f32 %v125
    %vm133 = vmor %vm131, %vm132
    %v134 = vsel %vm133, %v125, %v130
    %v135 = vrsqrt.pop %v124
    %v136 = vmul.f32 %v135, %v124
    %v137 = vmul.f32 %v136, %v135
    %v138 = vmul.f32 0.5, %v137
    %v139 = vsub.f32 1.5, %v138
    %v140 = vmul.f32 %v135, %v139
    %vm141 = vweird.f32 %v124
    %vm142 = vweird.f32 %v135
    %vm143 = vmor %vm141, %vm142
    %v144 = vsel %vm143, %v135, %v140
    %v145 = vmul.f32 %v113, %v134
    %v146 = vmul.f32 %v114, %v144
    %v148 = vperm.slane %v100, 0
    %v150 = vmul.f32 %v145, %v148
    %v151 = vmul.f32 %v146, %v148
    %v153 = vperm.slane %v101, 0
    %v155 = vadd.f32 %v150, %v153
    %v156 = vadd.f32 %v151, %v153
    %v157 = vadd.f32 %v53, %v155
    %v158 = vadd.f32 %v54, %v156
    %159 = vst [vmem:[#allocation7] sm:$0xff] %v157
    %160 = vst [vmem:[#allocation7 + $0x8] sm:$0xff] %v158
    // Predicated region
    $region30: #{tpu_custom_call.1} parent=1 // pred_check
      _
    $region31: #{tpu_custom_call.1} parent=1 // pred_check_branch
      %162 = sbr.rel (0) target = $region33
    $region32: #{tpu_custom_call.1} parent=1 // pred_region
      %164 = vsyncadd [#allocation4], 0
      %s165 = sshll.u32 [#allocation7], 4
      %s166 = int_to_ptr.vmem [resolvable:$true] %s165
      %s167 = sshll.u32 %s5, 4
      %s168 = int_to_ptr.hbm [resolvable:$true] %s167
      %173 = dma.vmem_to_hbm [thread:$0]  %s166, 256, %s168, [#allocation4], 128, 128, 8
    $region33: #{tpu_custom_call.1} parent=1 // pred_fallthru
      _
    // Predicated region
    $region34: #{tpu_custom_call.1} parent=1 // pred_check
      _
    $region35: #{tpu_custom_call.1} parent=1 // pred_check_branch
      %175 = sbr.rel (0) target = $region37
    $region36: #{tpu_custom_call.1} parent=1 // pred_region
      %177 = dma.done [#allocation4], 256
    $region37: #{tpu_custom_call.1} parent=1 // pred_fallthru
      _
    %178 = vsyncpa [#allocation3], 1
    %179 = vsyncpa [#allocation6], 1
    %180 = vsyncpa [#allocation4], 1

</llo_original>
